<compile_context>
chip_gen: v5e
topology: v5e:2x2
jax: 0.10.0
libtpu: 0.0.40
codegen_flags: <defaults>
</compile_context>

<pallas_src>
import jax
import jax.numpy as jnp
from jax.experimental import pallas as pl
from jax.experimental.pallas import tpu as pltpu

LANES = 128


def classifier_kernel(x_ref, w1_ref, b1_ref, w2_ref, b2_ref, o_ref):
    # dropout (eval mode) == identity
    x = x_ref[...]                                                      # (bm, 768) bf16
    h = jnp.dot(x, w1_ref[...], preferred_element_type=jnp.float32)    # MXU, f32 acc
    h = jnp.tanh(h + b1_ref[...])                                       # f32 EUP (v5e-safe)
    h = h.astype(jnp.bfloat16)                                          # bf16 into 2nd MXU pass
    # dropout (eval mode) == identity
    y = jnp.dot(h, w2_ref[...], preferred_element_type=jnp.float32)    # MXU, f32 acc
    y = y + b2_ref[...]                                                  # (bm, 128) padded
    o_ref[...] = y.astype(o_ref.dtype)                                  # lane-dense store


def classifier_forward(x, w1, b1, w2, b2, *, block_m=256):
    """Classifier.forward in eval mode.

    x : (B, 768) float          (any float dtype; cast to bf16 internally)
    w1: (384, 768), b1: (384,)  (PyTorch Linear convention: (out, in))
    w2: (C, 384),   b2: (C,)
    Returns (B, C) float32.
    """
    B, d_in = x.shape
    d_hid = w1.shape[0]
    num_cls = w2.shape[0]

    # --- layout / padding glue (outside the kernel) ---------------------------
    # Pad classifier width up to a multiple of 128 lanes -> unmasked stores.
    c_pad = pl.cdiv(num_cls, LANES) * LANES

    # Batch tile: single tile for small B, 256-row tiles (MXU-friendly,
    # pipeline-able, megacore-shardable) for large B; pad B to a multiple.
    if B <= block_m:
        bm = B
        b_pad = B
    else:
        bm = block_m
        b_pad = pl.cdiv(B, bm) * bm

    x_p = x if b_pad == B else jnp.pad(x, ((0, b_pad - B), (0, 0)))
    x_bf = x_p.astype(jnp.bfloat16)                                   # (b_pad, 768)
    w1_t = w1.T.astype(jnp.bfloat16)                                  # (768, 384)
    w2_t = (
        jnp.zeros((d_hid, c_pad), jnp.bfloat16)
        .at[:, :num_cls].set(w2.T.astype(jnp.bfloat16))
    )                                                                 # (384, c_pad)
    b1_2d = b1.reshape(1, d_hid).astype(jnp.float32)                  # (1, 384)
    b2_2d = (
        jnp.zeros((1, c_pad), jnp.float32)
        .at[:, :num_cls].set(b2.astype(jnp.float32))
    )                                                                 # (1, c_pad)

    grid = (b_pad // bm,)
    out_padded = pl.pallas_call(
        classifier_kernel,
        out_shape=jax.ShapeDtypeStruct((b_pad, c_pad), jnp.float32),
        grid_spec=pltpu.PrefetchScalarGridSpec(
            num_scalar_prefetch=0,
            grid=grid,
            in_specs=[
                pl.BlockSpec((bm, d_in), lambda i: (i, 0)),       # x tile (pipelined)
                pl.BlockSpec((d_in, d_hid), lambda i: (0, 0)),    # W1^T (resident, not re-DMA'd)
                pl.BlockSpec((1, d_hid), lambda i: (0, 0)),       # b1   (resident)
                pl.BlockSpec((d_hid, c_pad), lambda i: (0, 0)),   # W2^T padded (resident)
                pl.BlockSpec((1, c_pad), lambda i: (0, 0)),       # b2 padded (resident)
            ],
            out_specs=pl.BlockSpec((bm, c_pad), lambda i: (i, 0)),
        ),
        compiler_params=pltpu.CompilerParams(
            dimension_semantics=("parallel",),        # shards batch tiles across v7x's 2 TCs
            vmem_limit_bytes=28 * 1024 * 1024,        # stay inside v7x's 64 MiB VMEM
        ),
    )(x_bf, w1_t, b1_2d, w2_t, b2_2d)

    return out_padded[:B, :num_cls]


def init_params(key, num_cls, dtype=jnp.float32):
    """Deterministic synthetic parameters with PyTorch Linear shapes."""
    k1, k2, k3, k4 = jax.random.split(key, 4)
    w1 = jax.random.normal(k1, (384, 768), dtype) * 0.02
    b1 = jax.random.normal(k2, (384,), dtype) * 0.02
    w2 = jax.random.normal(k3, (num_cls, 384), dtype) * 0.02
    b2 = jax.random.normal(k4, (num_cls,), dtype) * 0.02
    return w1, b1, w2, b2


def _reference(x, w1, b1, w2, b2):
    # Pure-JAX f32 reference (dropout in eval mode == identity).
    return jnp.tanh(x @ w1.T + b1) @ w2.T + b2


if __name__ == "__main__":
    key = jax.random.PRNGKey(0)
    kx, kp, kx2 = jax.random.split(key, 3)

    num_cls = 10
    w1, b1, w2, b2 = init_params(kp, num_cls)

    # --- small batch: single grid step ---------------------------------------
    batch = 8
    x = jax.random.normal(kx, (batch, 768), jnp.float32)
    out = jax.block_until_ready(classifier_forward(x, w1, b1, w2, b2))
    ref = _reference(x, w1, b1, w2, b2)
    assert out.shape == (batch, num_cls)
    # bf16 weights/activations -> loosened tolerance vs f32 reference.
    assert jnp.allclose(out, ref, atol=2e-2, rtol=2e-2), "mismatch vs reference (small batch)"

    # --- larger batch: exercises batch padding + multi-tile grid -------------
    batch2 = 272  # > 256 and not a multiple -> pads to 512, grid=(2,)
    x2 = jax.random.normal(kx2, (batch2, 768), jnp.float32)
    out2 = jax.block_until_ready(classifier_forward(x2, w1, b1, w2, b2))
    ref2 = _reference(x2, w1, b1, w2, b2)
    assert out2.shape == (batch2, num_cls)
    assert jnp.allclose(out2, ref2, atol=2e-2, rtol=2e-2), "mismatch vs reference (tiled batch)"

    print("KERNEL_OK")
</pallas_src>

<mosaic_0001>
module attributes {stable_mosaic.version = 11 : i64} {
  func.func @classifier_kernel(%arg0: i32, %arg1: memref<8x768xbf16, #tpu.memory_space<vmem>>, %arg2: memref<768x384xbf16, #tpu.memory_space<vmem>>, %arg3: memref<1x384xf32, #tpu.memory_space<vmem>>, %arg4: memref<384x128xbf16, #tpu.memory_space<vmem>>, %arg5: memref<1x128xf32, #tpu.memory_space<vmem>>, %arg6: memref<8x128xf32, #tpu.memory_space<vmem>>) attributes {dimension_semantics = [#tpu.dimension_semantics<parallel>], iteration_bounds = array<i64: 1>, scalar_prefetch = 0 : i64, scratch_operands = 0 : i64, tpu.core_type = #tpu.core_type<tc>, window_params = [{transform_indices = @transform_0, window_bounds = array<i64: 8, 768>}, {pipeline_mode = #tpu.pipeline_mode<synchronous>, transform_indices = @transform_1, window_bounds = array<i64: 768, 384>}, {pipeline_mode = #tpu.pipeline_mode<synchronous>, transform_indices = @transform_2, window_bounds = array<i64: 1, 384>}, {pipeline_mode = #tpu.pipeline_mode<synchronous>, transform_indices = @transform_3, window_bounds = array<i64: 384, 128>}, {pipeline_mode = #tpu.pipeline_mode<synchronous>, transform_indices = @transform_4, window_bounds = array<i64: 1, 128>}, {transform_indices = @transform_5, window_bounds = array<i64: 8, 128>}]} {
    %c0 = arith.constant 0 : index
    %c0_0 = arith.constant 0 : index
    %0 = vector.load %arg1[%c0, %c0_0] : memref<8x768xbf16, #tpu.memory_space<vmem>>, vector<8x768xbf16>
    %c0_1 = arith.constant 0 : index
    %c0_2 = arith.constant 0 : index
    %1 = vector.load %arg2[%c0_1, %c0_2] : memref<768x384xbf16, #tpu.memory_space<vmem>>, vector<768x384xbf16>
    %cst = arith.constant dense<0.000000e+00> : vector<8x384xf32>
    %2 = tpu.matmul %0, %1, %cst {dimension_numbers = #tpu.dot_dimension_numbers<[1], [0], [0], [1], [0, 0, 1, 1], [], []>} : vector<8x768xbf16>, vector<768x384xbf16>, vector<8x384xf32> -> vector<8x384xf32>
    %c0_3 = arith.constant 0 : index
    %c0_4 = arith.constant 0 : index
    %3 = vector.load %arg3[%c0_3, %c0_4] : memref<1x384xf32, #tpu.memory_space<vmem>>, vector<1x384xf32>
    %4 = vector.broadcast %3 : vector<1x384xf32> to vector<8x384xf32>
    %5 = arith.addf %2, %4 : vector<8x384xf32>
    %6 = math.tanh %5 : vector<8x384xf32>
    %7 = arith.truncf %6 : vector<8x384xf32> to vector<8x384xbf16>
    %c0_5 = arith.constant 0 : index
    %c0_6 = arith.constant 0 : index
    %8 = vector.load %arg4[%c0_5, %c0_6] : memref<384x128xbf16, #tpu.memory_space<vmem>>, vector<384x128xbf16>
    %cst_7 = arith.constant dense<0.000000e+00> : vector<8x128xf32>
    %9 = tpu.matmul %7, %8, %cst_7 {dimension_numbers = #tpu.dot_dimension_numbers<[1], [0], [0], [1], [0, 0, 1, 1], [], []>} : vector<8x384xbf16>, vector<384x128xbf16>, vector<8x128xf32> -> vector<8x128xf32>
    %c0_8 = arith.constant 0 : index
    %c0_9 = arith.constant 0 : index
    %10 = vector.load %arg5[%c0_8, %c0_9] : memref<1x128xf32, #tpu.memory_space<vmem>>, vector<1x128xf32>
    %11 = vector.broadcast %10 : vector<1x128xf32> to vector<8x128xf32>
    %12 = arith.addf %9, %11 : vector<8x128xf32>
    %c0_10 = arith.constant 0 : index
    %c0_11 = arith.constant 0 : index
    %13 = vector.load %arg6[%c0_10, %c0_11] : memref<8x128xf32, #tpu.memory_space<vmem>>, vector<8x128xf32>
    tpu.vector_store %arg6[%c0_10, %c0_11], %12 {strides = array<i32>} : memref<8x128xf32, #tpu.memory_space<vmem>>, vector<8x128xf32>,
    return
  }
  func.func @transform_0(%arg0: i32) -> (i32, i32) {
    %c0_i32 = arith.constant 0 : i32
    %c0_i32_0 = arith.constant 0 : i32
    return %arg0, %c0_i32 : i32, i32
  }
  func.func @transform_1(%arg0: i32) -> (i32, i32) {
    %c0_i32 = arith.constant 0 : i32
    %c0_i32_0 = arith.constant 0 : i32
    %c0_i32_1 = arith.constant 0 : i32
    return %c0_i32, %c0_i32_0 : i32, i32
  }
  func.func @transform_2(%arg0: i32) -> (i32, i32) {
    %c0_i32 = arith.constant 0 : i32
    %c0_i32_0 = arith.constant 0 : i32
    %c0_i32_1 = arith.constant 0 : i32
    return %c0_i32, %c0_i32_0 : i32, i32
  }
  func.func @transform_3(%arg0: i32) -> (i32, i32) {
    %c0_i32 = arith.constant 0 : i32
    %c0_i32_0 = arith.constant 0 : i32
    %c0_i32_1 = arith.constant 0 : i32
    return %c0_i32, %c0_i32_0 : i32, i32
  }
  func.func @transform_4(%arg0: i32) -> (i32, i32) {
    %c0_i32 = arith.constant 0 : i32
    %c0_i32_0 = arith.constant 0 : i32
    %c0_i32_1 = arith.constant 0 : i32
    return %c0_i32, %c0_i32_0 : i32, i32
  }
  func.func @transform_5(%arg0: i32) -> (i32, i32) {
    %c0_i32 = arith.constant 0 : i32
    %c0_i32_0 = arith.constant 0 : i32
    return %arg0, %c0_i32 : i32, i32
  }
}

</mosaic_0001>

<llo_original>
// kernel: tpu_custom_call.1
$region0: #{tpu_custom_call.1}
  #allocation0 [shape = 'u32[]', space=smem, size = 0x4, offset = 0x4, fixed_abs, tag = 'smem constant byte address 0x4 - core index']
  #allocation1 [shape = 'u32[72,128]{1,0:T(1,128)}', space=vmem, size = 0x9000, scoped, tag = 'internal scratch']
  %s0 = inlined_call_operand.hbm [shape: bf16[8,768], index: 0, kind: input, shape index: {}]
  %s1 = inlined_call_operand.hbm [shape: bf16[768,384], index: 1, kind: input, shape index: {}]
  %s2 = inlined_call_operand.hbm [shape: f32[1,384], index: 2, kind: input, shape index: {}]
  %s3 = inlined_call_operand.hbm [shape: bf16[384,128], index: 3, kind: input, shape index: {}]
  %s4 = inlined_call_operand.vmem [shape: f32[1,128], index: 4, kind: input, shape index: {}]
  %s5 = inlined_call_operand.hbm [shape: f32[8,128], index: 5, kind: output, shape index: {}]
  %s6 = sld [smem:[#allocation0]]
  $region46: #{tpu_custom_call.1} parent=0
    _
  %s8 = ssub.s32 1, %s6
  %s9 = scalar_select 0, %s8, %s6
  $region1: #{tpu_custom_call.1} parent=0
    #allocation2 [shape = 'u8[12288]{0}', space=vmem, size = 0x3000, scoped, tag = 'input window, operand 0, single buffered']
    #allocation3 [shape = 's32[1]{0}', space=sflag, size = 0x4, scoped, tag = 'scoped memory for tpu_custom_call.1']
    #allocation4 [shape = 's32[1]{0}', space=sflag, size = 0x4, scoped, tag = 'scoped memory for tpu_custom_call.1']
    #allocation5 [shape = 'u8[589824]{0}', space=vmem, size = 0x90000, scoped, tag = 'input window, operand 1, single buffered']
    #allocation6 [shape = 's32[1]{0}', space=sflag, size = 0x4, scoped, tag = 'scoped memory for tpu_custom_call.1']
    #allocation7 [shape = 'u8[1536]{0}', space=vmem, size = 0x800, scoped, tag = 'input window, operand 2, single buffered']
    #allocation8 [shape = 'u8[98304]{0}', space=vmem, size = 0x18000, scoped, tag = 'input window, operand 3, single buffered']
    #allocation9 [shape = 's32[1]{0}', space=sflag, size = 0x4, scoped, tag = 'scoped memory for tpu_custom_call.1']
    #allocation10 [shape = 'u8[4096]{0}', space=vmem, size = 0x1000, scoped, tag = 'output window, operand 0, single buffered']
    %10 = vsyncpa [#allocation3], 0
    %11 = vsyncpa [#allocation6], 0
    %12 = vsyncpa [#allocation9], 0
    %13 = vsyncpa [#allocation4], 0
    // Predicated region
    $region2: #{tpu_custom_call.1} parent=1 // pred_check
      _
    $region3: #{tpu_custom_call.1} parent=1 // pred_check_branch
      %15 = sbr.rel (0) target = $region5
    $region4: #{tpu_custom_call.1} parent=1 // pred_region
      %17 = vsyncadd [#allocation3], 0
      %s19 = sshll.u32 %s0, 4
      %s20 = int_to_ptr.hbm [resolvable:$true] %s19
      %s21 = sshll.u32 [#allocation2], 4
      %s22 = int_to_ptr.vmem [resolvable:$true] %s21
      %24 = dma.hbm_to_vmem [thread:$0]  %s20, 384, %s22, [#allocation3]
    $region5: #{tpu_custom_call.1} parent=1 // pred_fallthru
      _
    // Predicated region
    $region6: #{tpu_custom_call.1} parent=1 // pred_check
      _
    $region7: #{tpu_custom_call.1} parent=1 // pred_check_branch
      %26 = sbr.rel (0) target = $region9
    $region8: #{tpu_custom_call.1} parent=1 // pred_region
      %28 = vsyncadd [#allocation6], 0
      %s29 = sshll.u32 %s1, 4
      %s30 = int_to_ptr.hbm [resolvable:$true] %s29
      %s31 = sshll.u32 [#allocation5], 4
      %s32 = int_to_ptr.vmem [resolvable:$true] %s31
      %37 = dma.hbm_to_vmem [thread:$0]  %s30, 18432, %s32, [#allocation6], 192, 192, 12
    $region9: #{tpu_custom_call.1} parent=1 // pred_fallthru
      _
    // Predicated region
    $region10: #{tpu_custom_call.1} parent=1 // pred_check
      _
    $region11: #{tpu_custom_call.1} parent=1 // pred_check_branch
      %39 = sbr.rel (0) target = $region13
    $region12: #{tpu_custom_call.1} parent=1 // pred_region
      %41 = vsyncadd [#allocation6], 0
      %s43 = sshll.u32 %s2, 4
      %s44 = int_to_ptr.hbm [resolvable:$true] %s43
      %s45 = sshll.u32 [#allocation7], 4
      %s46 = int_to_ptr.vmem [resolvable:$true] %s45
      %48 = dma.hbm_to_vmem [thread:$0]  %s44, 48, %s46, [#allocation6]
    $region13: #{tpu_custom_call.1} parent=1 // pred_fallthru
      _
    // Predicated region
    $region14: #{tpu_custom_call.1} parent=1 // pred_check
      _
    $region15: #{tpu_custom_call.1} parent=1 // pred_check_branch
      %50 = sbr.rel (0) target = $region17
    $region16: #{tpu_custom_call.1} parent=1 // pred_region
      %52 = vsyncadd [#allocation9], 0
      %s53 = sshll.u32 %s3, 4
      %s54 = int_to_ptr.hbm [resolvable:$true] %s53
      %s55 = sshll.u32 [#allocation8], 4
      %s56 = int_to_ptr.vmem [resolvable:$true] %s55
      %61 = dma.hbm_to_vmem [thread:$0]  %s54, 3072, %s56, [#allocation9], 64, 64, 4
    $region17: #{tpu_custom_call.1} parent=1 // pred_fallthru
      _
    // Predicated region
    $region18: #{tpu_custom_call.1} parent=1 // pred_check
      _
    $region19: #{tpu_custom_call.1} parent=1 // pred_check_branch
      %63 = sbr.rel (0) target = $region21
    $region20: #{tpu_custom_call.1} parent=1 // pred_region
      _
    $region21: #{tpu_custom_call.1} parent=1 // pred_fallthru
      _
    // Predicated region
    $region22: #{tpu_custom_call.1} parent=1 // pred_check
      _
    $region23: #{tpu_custom_call.1} parent=1 // pred_check_branch
      %65 = sbr.rel (0) target = $region25
    $region24: #{tpu_custom_call.1} parent=1 // pred_region
      %67 = dma.done [#allocation3], 384
    $region25: #{tpu_custom_call.1} parent=1 // pred_fallthru
      _
    // Predicated region
    $region26: #{tpu_custom_call.1} parent=1 // pred_check
      _
    $region27: #{tpu_custom_call.1} parent=1 // pred_check_branch
      %69 = sbr.rel (0) target = $region29
    $region28: #{tpu_custom_call.1} parent=1 // pred_region
      %71 = dma.done [#allocation6], 18432
    $region29: #{tpu_custom_call.1} parent=1 // pred_fallthru
      _
    // Predicated region
    $region30: #{tpu_custom_call.1} parent=1 // pred_check
      _
    $region31: #{tpu_custom_call.1} parent=1 // pred_check_branch
      %73 = sbr.rel (0) target = $region33
    $region32: #{tpu_custom_call.1} parent=1 // pred_region
      %75 = dma.done [#allocation6], 48
    $region33: #{tpu_custom_call.1} parent=1 // pred_fallthru
      _
    // Predicated region
    $region34: #{tpu_custom_call.1} parent=1 // pred_check
      _
    $region35: #{tpu_custom_call.1} parent=1 // pred_check_branch
      %77 = sbr.rel (0) target = $region37
    $region36: #{tpu_custom_call.1} parent=1 // pred_region
      %79 = dma.done [#allocation9], 3072
    $region37: #{tpu_custom_call.1} parent=1 // pred_fallthru
      _
    %v80 = vld [vmem:[#allocation2] sm:$0xff]
    %v81 = vld [vmem:[#allocation2 + $0x8] sm:$0xff]
    %v82 = vld [vmem:[#allocation2 + $0x10] sm:$0xff]
    %v83 = vld [vmem:[#allocation5] sm:$0xff]
    %v84 = vld [vmem:[#allocation5 + $0x8] sm:$0xf]
    %v85 = vld [vmem:[#allocation5 + $0xc] sm:$0xff]
    %v86 = vld [vmem:[#allocation5 + $0x14] sm:$0xf]
    %v87 = vld [vmem:[#allocation5 + $0x18] sm:$0xff]
    %v88 = vld [vmem:[#allocation5 + $0x20] sm:$0xf]
    %v89 = vld [vmem:[#allocation5 + $0x24] sm:$0xff]
    %v90 = vld [vmem:[#allocation5 + $0x2c] sm:$0xf]
    %v91 = vld [vmem:[#allocation5 + $0x30] sm:$0xff]
    %v92 = vld [vmem:[#allocation5 + $0x38] sm:$0xf]
    %v93 = vld [vmem:[#allocation5 + $0x3c] sm:$0xff]
    %v94 = vld [vmem:[#allocation5 + $0x44] sm:$0xf]
    %v95 = vld [vmem:[#allocation5 + $0x48] sm:$0xff]
    %v96 = vld [vmem:[#allocation5 + $0x50] sm:$0xf]
    %v97 = vld [vmem:[#allocation5 + $0x54] sm:$0xff]
    %v98 = vld [vmem:[#allocation5 + $0x5c] sm:$0xf]
    %v99 = vld [vmem:[#allocation5 + $0x60] sm:$0xff]
    %v100 = vld [vmem:[#allocation5 + $0x68] sm:$0xf]
    %v101 = vld [vmem:[#allocation5 + $0x6c] sm:$0xff]
    %v102 = vld [vmem:[#allocation5 + $0x74] sm:$0xf]
    %v103 = vld [vmem:[#allocation5 + $0x78] sm:$0xff]
    %v104 = vld [vmem:[#allocation5 + $0x80] sm:$0xf]
    %v105 = vld [vmem:[#allocation5 + $0x84] sm:$0xff]
    %v106 = vld [vmem:[#allocation5 + $0x8c] sm:$0xf]
    %v107 = vld [vmem:[#allocation5 + $0x90] sm:$0xff]
    %v108 = vld [vmem:[#allocation5 + $0x98] sm:$0xf]
    %v109 = vld [vmem:[#allocation5 + $0x9c] sm:$0xff]
    %v110 = vld [vmem:[#allocation5 + $0xa4] sm:$0xf]
    %v111 = vld [vmem:[#allocation5 + $0xa8] sm:$0xff]
    %v112 = vld [vmem:[#allocation5 + $0xb0] sm:$0xf]
    %v113 = vld [vmem:[#allocation5 + $0xb4] sm:$0xff]
    %v114 = vld [vmem:[#allocation5 + $0xbc] sm:$0xf]
    %v115 = vld [vmem:[#allocation5 + $0xc0] sm:$0xff]
    %v116 = vld [vmem:[#allocation5 + $0xc8] sm:$0xf]
    %v117 = vld [vmem:[#allocation5 + $0xcc] sm:$0xff]
    %v118 = vld [vmem:[#allocation5 + $0xd4] sm:$0xf]
    %v119 = vld [vmem:[#allocation5 + $0xd8] sm:$0xff]
    %v120 = vld [vmem:[#allocation5 + $0xe0] sm:$0xf]
    %v121 = vld [vmem:[#allocation5 + $0xe4] sm:$0xff]
    %v122 = vld [vmem:[#allocation5 + $0xec] sm:$0xf]
    %v123 = vld [vmem:[#allocation5 + $0xf0] sm:$0xff]
    %v124 = vld [vmem:[#allocation5 + $0xf8] sm:$0xf]
    %v125 = vld [vmem:[#allocation5 + $0xfc] sm:$0xff]
    %v126 = vld [vmem:[#allocation5 + $0x104] sm:$0xf]
    %v127 = vld [vmem:[#allocation5 + $0x108] sm:$0xff]
    %v128 = vld [vmem:[#allocation5 + $0x110] sm:$0xf]
    %v129 = vld [vmem:[#allocation5 + $0x114] sm:$0xff]
    %v130 = vld [vmem:[#allocation5 + $0x11c] sm:$0xf]
    %v131 = vld [vmem:[#allocation5 + $0x120] sm:$0xff]
    %v132 = vld [vmem:[#allocation5 + $0x128] sm:$0xf]
    %v133 = vld [vmem:[#allocation5 + $0x12c] sm:$0xff]
    %v134 = vld [vmem:[#allocation5 + $0x134] sm:$0xf]
    %v135 = vld [vmem:[#allocation5 + $0x138] sm:$0xff]
    %v136 = vld [vmem:[#allocation5 + $0x140] sm:$0xf]
    %v137 = vld [vmem:[#allocation5 + $0x144] sm:$0xff]
    %v138 = vld [vmem:[#allocation5 + $0x14c] sm:$0xf]
    %v139 = vld [vmem:[#allocation5 + $0x150] sm:$0xff]
    %v140 = vld [vmem:[#allocation5 + $0x158] sm:$0xf]
    %v141 = vld [vmem:[#allocation5 + $0x15c] sm:$0xff]
    %v142 = vld [vmem:[#allocation5 + $0x164] sm:$0xf]
    %v143 = vld [vmem:[#allocation5 + $0x168] sm:$0xff]
    %v144 = vld [vmem:[#allocation5 + $0x170] sm:$0xf]
    %v145 = vld [vmem:[#allocation5 + $0x174] sm:$0xff]
    %v146 = vld [vmem:[#allocation5 + $0x17c] sm:$0xf]
    %v147 = vld [vmem:[#allocation5 + $0x180] sm:$0xff]
    %v148 = vld [vmem:[#allocation5 + $0x188] sm:$0xf]
    %v149 = vld [vmem:[#allocation5 + $0x18c] sm:$0xff]
    %v150 = vld [vmem:[#allocation5 + $0x194] sm:$0xf]
    %v151 = vld [vmem:[#allocation5 + $0x198] sm:$0xff]
    %v152 = vld [vmem:[#allocation5 + $0x1a0] sm:$0xf]
    %v153 = vld [vmem:[#allocation5 + $0x1a4] sm:$0xff]
    %v154 = vld [vmem:[#allocation5 + $0x1ac] sm:$0xf]
    %v155 = vld [vmem:[#allocation5 + $0x1b0] sm:$0xff]
    %v156 = vld [vmem:[#allocation5 + $0x1b8] sm:$0xf]
    %v157 = vld [vmem:[#allocation5 + $0x1bc] sm:$0xff]
    %v158 = vld [vmem:[#allocation5 + $0x1c4] sm:$0xf]
    %v159 = vld [vmem:[#allocation5 + $0x1c8] sm:$0xff]
    %v160 = vld [vmem:[#allocation5 + $0x1d0] sm:$0xf]
    %v161 = vld [vmem:[#allocation5 + $0x1d4] sm:$0xff]
    %v162 = vld [vmem:[#allocation5 + $0x1dc] sm:$0xf]
    %v163 = vld [vmem:[#allocation5 + $0x1e0] sm:$0xff]
    %v164 = vld [vmem:[#allocation5 + $0x1e8] sm:$0xf]
    %v165 = vld [vmem:[#allocation5 + $0x1ec] sm:$0xff]
    %v166 = vld [vmem:[#allocation5 + $0x1f4] sm:$0xf]
    %v167 = vld [vmem:[#allocation5 + $0x1f8] sm:$0xff]
    %v168 = vld [vmem:[#allocation5 + $0x200] sm:$0xf]
    %v169 = vld [vmem:[#allocation5 + $0x204] sm:$0xff]
    %v170 = vld [vmem:[#allocation5 + $0x20c] sm:$0xf]
    %v171 = vld [vmem:[#allocation5 + $0x210] sm:$0xff]
    %v172 = vld [vmem:[#allocation5 + $0x218] sm:$0xf]
    %v173 = vld [vmem:[#allocation5 + $0x21c] sm:$0xff]
    %v174 = vld [vmem:[#allocation5 + $0x224] sm:$0xf]
    %v175 = vld [vmem:[#allocation5 + $0x228] sm:$0xff]
    %v176 = vld [vmem:[#allocation5 + $0x230] sm:$0xf]
    %v177 = vld [vmem:[#allocation5 + $0x234] sm:$0xff]
    %v178 = vld [vmem:[#allocation5 + $0x23c] sm:$0xf]
    %v179 = vld [vmem:[#allocation5 + $0x240] sm:$0xff]
    %v180 = vld [vmem:[#allocation5 + $0x248] sm:$0xf]
    %v181 = vld [vmem:[#allocation5 + $0x24c] sm:$0xff]
    %v182 = vld [vmem:[#allocation5 + $0x254] sm:$0xf]
    %v183 = vld [vmem:[#allocation5 + $0x258] sm:$0xff]
    %v184 = vld [vmem:[#allocation5 + $0x260] sm:$0xf]
    %v185 = vld [vmem:[#allocation5 + $0x264] sm:$0xff]
    %v186 = vld [vmem:[#allocation5 + $0x26c] sm:$0xf]
    %v187 = vld [vmem:[#allocation5 + $0x270] sm:$0xff]
    %v188 = vld [vmem:[#allocation5 + $0x278] sm:$0xf]
    %v189 = vld [vmem:[#allocation5 + $0x27c] sm:$0xff]
    %v190 = vld [vmem:[#allocation5 + $0x284] sm:$0xf]
    %v191 = vld [vmem:[#allocation5 + $0x288] sm:$0xff]
    %v192 = vld [vmem:[#allocation5 + $0x290] sm:$0xf]
    %v193 = vld [vmem:[#allocation5 + $0x294] sm:$0xff]
    %v194 = vld [vmem:[#allocation5 + $0x29c] sm:$0xf]
    %v195 = vld [vmem:[#allocation5 + $0x2a0] sm:$0xff]
    %v196 = vld [vmem:[#allocation5 + $0x2a8] sm:$0xf]
    %v197 = vld [vmem:[#allocation5 + $0x2ac] sm:$0xff]
    %v198 = vld [vmem:[#allocation5 + $0x2b4] sm:$0xf]
    %v199 = vld [vmem:[#allocation5 + $0x2b8] sm:$0xff]
    %v200 = vld [vmem:[#allocation5 + $0x2c0] sm:$0xf]
    %v201 = vld [vmem:[#allocation5 + $0x2c4] sm:$0xff]
    %v202 = vld [vmem:[#allocation5 + $0x2cc] sm:$0xf]
    %v203 = vld [vmem:[#allocation5 + $0x2d0] sm:$0xff]
    %v204 = vld [vmem:[#allocation5 + $0x2d8] sm:$0xf]
    %v205 = vld [vmem:[#allocation5 + $0x2dc] sm:$0xff]
    %v206 = vld [vmem:[#allocation5 + $0x2e4] sm:$0xf]
    %v207 = vld [vmem:[#allocation5 + $0x2e8] sm:$0xff]
    %v208 = vld [vmem:[#allocation5 + $0x2f0] sm:$0xf]
    %v209 = vld [vmem:[#allocation5 + $0x2f4] sm:$0xff]
    %v210 = vld [vmem:[#allocation5 + $0x2fc] sm:$0xf]
    %v211 = vld [vmem:[#allocation5 + $0x300] sm:$0xff]
    %v212 = vld [vmem:[#allocation5 + $0x308] sm:$0xf]
    %v213 = vld [vmem:[#allocation5 + $0x30c] sm:$0xff]
    %v214 = vld [vmem:[#allocation5 + $0x314] sm:$0xf]
    %v215 = vld [vmem:[#allocation5 + $0x318] sm:$0xff]
    %v216 = vld [vmem:[#allocation5 + $0x320] sm:$0xf]
    %v217 = vld [vmem:[#allocation5 + $0x324] sm:$0xff]
    %v218 = vld [vmem:[#allocation5 + $0x32c] sm:$0xf]
    %v219 = vld [vmem:[#allocation5 + $0x330] sm:$0xff]
    %v220 = vld [vmem:[#allocation5 + $0x338] sm:$0xf]
    %v221 = vld [vmem:[#allocation5 + $0x33c] sm:$0xff]
    %v222 = vld [vmem:[#allocation5 + $0x344] sm:$0xf]
    %v223 = vld [vmem:[#allocation5 + $0x348] sm:$0xff]
    %v224 = vld [vmem:[#allocation5 + $0x350] sm:$0xf]
    %v225 = vld [vmem:[#allocation5 + $0x354] sm:$0xff]
    %v226 = vld [vmem:[#allocation5 + $0x35c] sm:$0xf]
    %v227 = vld [vmem:[#allocation5 + $0x360] sm:$0xff]
    %v228 = vld [vmem:[#allocation5 + $0x368] sm:$0xf]
    %v229 = vld [vmem:[#allocation5 + $0x36c] sm:$0xff]
    %v230 = vld [vmem:[#allocation5 + $0x374] sm:$0xf]
    %v231 = vld [vmem:[#allocation5 + $0x378] sm:$0xff]
    %v232 = vld [vmem:[#allocation5 + $0x380] sm:$0xf]
    %v233 = vld [vmem:[#allocation5 + $0x384] sm:$0xff]
    %v234 = vld [vmem:[#allocation5 + $0x38c] sm:$0xf]
    %v235 = vld [vmem:[#allocation5 + $0x390] sm:$0xff]
    %v236 = vld [vmem:[#allocation5 + $0x398] sm:$0xf]
    %v237 = vld [vmem:[#allocation5 + $0x39c] sm:$0xff]
    %v238 = vld [vmem:[#allocation5 + $0x3a4] sm:$0xf]
    %v239 = vld [vmem:[#allocation5 + $0x3a8] sm:$0xff]
    %v240 = vld [vmem:[#allocation5 + $0x3b0] sm:$0xf]
    %v241 = vld [vmem:[#allocation5 + $0x3b4] sm:$0xff]
    %v242 = vld [vmem:[#allocation5 + $0x3bc] sm:$0xf]
    %v243 = vld [vmem:[#allocation5 + $0x3c0] sm:$0xff]
    %v244 = vld [vmem:[#allocation5 + $0x3c8] sm:$0xf]
    %v245 = vld [vmem:[#allocation5 + $0x3cc] sm:$0xff]
    %v246 = vld [vmem:[#allocation5 + $0x3d4] sm:$0xf]
    %v247 = vld [vmem:[#allocation5 + $0x3d8] sm:$0xff]
    %v248 = vld [vmem:[#allocation5 + $0x3e0] sm:$0xf]
    %v249 = vld [vmem:[#allocation5 + $0x3e4] sm:$0xff]
    %v250 = vld [vmem:[#allocation5 + $0x3ec] sm:$0xf]
    %v251 = vld [vmem:[#allocation5 + $0x3f0] sm:$0xff]
    %v252 = vld [vmem:[#allocation5 + $0x3f8] sm:$0xf]
    %v253 = vld [vmem:[#allocation5 + $0x3fc] sm:$0xff]
    %v254 = vld [vmem:[#allocation5 + $0x404] sm:$0xf]
    %v255 = vld [vmem:[#allocation5 + $0x408] sm:$0xff]
    %v256 = vld [vmem:[#allocation5 + $0x410] sm:$0xf]
    %v257 = vld [vmem:[#allocation5 + $0x414] sm:$0xff]
    %v258 = vld [vmem:[#allocation5 + $0x41c] sm:$0xf]
    %v259 = vld [vmem:[#allocation5 + $0x420] sm:$0xff]
    %v260 = vld [vmem:[#allocation5 + $0x428] sm:$0xf]
    %v261 = vld [vmem:[#allocation5 + $0x42c] sm:$0xff]
    %v262 = vld [vmem:[#allocation5 + $0x434] sm:$0xf]
    %v263 = vld [vmem:[#allocation5 + $0x438] sm:$0xff]
    %v264 = vld [vmem:[#allocation5 + $0x440] sm:$0xf]
    %v265 = vld [vmem:[#allocation5 + $0x444] sm:$0xff]
    %v266 = vld [vmem:[#allocation5 + $0x44c] sm:$0xf]
    %v267 = vld [vmem:[#allocation5 + $0x450] sm:$0xff]
    %v268 = vld [vmem:[#allocation5 + $0x458] sm:$0xf]
    %v269 = vld [vmem:[#allocation5 + $0x45c] sm:$0xff]
    %v270 = vld [vmem:[#allocation5 + $0x464] sm:$0xf]
    %v271 = vld [vmem:[#allocation5 + $0x468] sm:$0xff]
    %v272 = vld [vmem:[#allocation5 + $0x470] sm:$0xf]
    %v273 = vld [vmem:[#allocation5 + $0x474] sm:$0xff]
    %v274 = vld [vmem:[#allocation5 + $0x47c] sm:$0xf]
    %v275 = vld [vmem:[#allocation7] sm:$0x7]
    %v277 = vperm.slane %v275, 0
    %v278 = vperm.slane %v275, 1
    %v279 = vperm.slane %v275, 2
    %v286 = vunpack.c.l.b16 %v80
    %v287 = vunpack.c.h.b16 %v80
    %v288 = vunpack.c.l.b16 %v81
    %v289 = vunpack.c.h.b16 %v81
    %v290 = vunpack.c.l.b16 %v82
    %v291 = vunpack.c.h.b16 %v82
    %v292 = vpack.c.b16 %v286, %v286
    %v293 = vpack.c.b16 %v287, %v287
    %v294 = vpack.c.b16 %v288, %v288
    %v295 = vpack.c.b16 %v289, %v289
    %v296 = vpack.c.b16 %v290, %v290
    %v297 = vpack.c.b16 %v291, %v291
    %v496 = vunpack.c.l.b16 %v83
    %v497 = vunpack.c.h.b16 %v83
    %v498 = vunpack.c.l.b16 %v84
    %v499 = vunpack.c.l.b16 %v85
    %v500 = vunpack.c.h.b16 %v85
    %v501 = vunpack.c.l.b16 %v86
    %v502 = vunpack.c.l.b16 %v87
    %v503 = vunpack.c.h.b16 %v87
    %v504 = vunpack.c.l.b16 %v88
    %v505 = vunpack.c.l.b16 %v89
    %v506 = vunpack.c.h.b16 %v89
    %v507 = vunpack.c.l.b16 %v90
    %v508 = vunpack.c.l.b16 %v91
    %v509 = vunpack.c.h.b16 %v91
    %v510 = vunpack.c.l.b16 %v92
    %v511 = vunpack.c.l.b16 %v93
    %v512 = vunpack.c.h.b16 %v93
    %v513 = vunpack.c.l.b16 %v94
    %v514 = vunpack.c.l.b16 %v95
    %v515 = vunpack.c.h.b16 %v95
    %v516 = vunpack.c.l.b16 %v96
    %v517 = vunpack.c.l.b16 %v97
    %v518 = vunpack.c.h.b16 %v97
    %v519 = vunpack.c.l.b16 %v98
    %v520 = vunpack.c.l.b16 %v99
    %v521 = vunpack.c.h.b16 %v99
    %v522 = vunpack.c.l.b16 %v100
    %v523 = vunpack.c.l.b16 %v101
    %v524 = vunpack.c.h.b16 %v101
    %v525 = vunpack.c.l.b16 %v102
    %v526 = vunpack.c.l.b16 %v103
    %v527 = vunpack.c.h.b16 %v103
    %v528 = vunpack.c.l.b16 %v104
    %v529 = vunpack.c.l.b16 %v105
    %v530 = vunpack.c.h.b16 %v105
    %v531 = vunpack.c.l.b16 %v106
    %v532 = vunpack.c.l.b16 %v107
    %v533 = vunpack.c.h.b16 %v107
    %v534 = vunpack.c.l.b16 %v108
    %v535 = vunpack.c.l.b16 %v109
    %v536 = vunpack.c.h.b16 %v109
    %v537 = vunpack.c.l.b16 %v110
    %v538 = vunpack.c.l.b16 %v111
    %v539 = vunpack.c.h.b16 %v111
    %v540 = vunpack.c.l.b16 %v112
    %v541 = vunpack.c.l.b16 %v113
    %v542 = vunpack.c.h.b16 %v113
    %v543 = vunpack.c.l.b16 %v114
    %v544 = vunpack.c.l.b16 %v115
    %v545 = vunpack.c.h.b16 %v115
    %v546 = vunpack.c.l.b16 %v116
    %v547 = vunpack.c.l.b16 %v117
    %v548 = vunpack.c.h.b16 %v117
    %v549 = vunpack.c.l.b16 %v118
    %v550 = vunpack.c.l.b16 %v119
    %v551 = vunpack.c.h.b16 %v119
    %v552 = vunpack.c.l.b16 %v120
    %v553 = vunpack.c.l.b16 %v121
    %v554 = vunpack.c.h.b16 %v121
    %v555 = vunpack.c.l.b16 %v122
    %v556 = vunpack.c.l.b16 %v123
    %v557 = vunpack.c.h.b16 %v123
    %v558 = vunpack.c.l.b16 %v124
    %v559 = vunpack.c.l.b16 %v125
    %v560 = vunpack.c.h.b16 %v125
    %v561 = vunpack.c.l.b16 %v126
    %v562 = vunpack.c.l.b16 %v127
    %v563 = vunpack.c.h.b16 %v127
    %v564 = vunpack.c.l.b16 %v128
    %v565 = vunpack.c.l.b16 %v129
    %v566 = vunpack.c.h.b16 %v129
    %v567 = vunpack.c.l.b16 %v130
    %v568 = vunpack.c.l.b16 %v131
    %v569 = vunpack.c.h.b16 %v131
    %v570 = vunpack.c.l.b16 %v132
    %v571 = vunpack.c.l.b16 %v133
    %v572 = vunpack.c.h.b16 %v133
    %v573 = vunpack.c.l.b16 %v134
    %v574 = vunpack.c.l.b16 %v135
    %v575 = vunpack.c.h.b16 %v135
    %v576 = vunpack.c.l.b16 %v136
    %v577 = vunpack.c.l.b16 %v137
    %v578 = vunpack.c.h.b16 %v137
    %v579 = vunpack.c.l.b16 %v138
    %v580 = vunpack.c.l.b16 %v139
    %v581 = vunpack.c.h.b16 %v139
    %v582 = vunpack.c.l.b16 %v140
    %v583 = vunpack.c.l.b16 %v141
    %v584 = vunpack.c.h.b16 %v141
    %v585 = vunpack.c.l.b16 %v142
    %v586 = vunpack.c.l.b16 %v143
    %v587 = vunpack.c.h.b16 %v143
    %v588 = vunpack.c.l.b16 %v144
    %v589 = vunpack.c.l.b16 %v145
    %v590 = vunpack.c.h.b16 %v145
    %v591 = vunpack.c.l.b16 %v146
    %v592 = vunpack.c.l.b16 %v147
    %v593 = vunpack.c.h.b16 %v147
    %v594 = vunpack.c.l.b16 %v148
    %v595 = vunpack.c.l.b16 %v149
    %v596 = vunpack.c.h.b16 %v149
    %v597 = vunpack.c.l.b16 %v150
    %v598 = vunpack.c.l.b16 %v151
    %v599 = vunpack.c.h.b16 %v151
    %v600 = vunpack.c.l.b16 %v152
    %v601 = vunpack.c.l.b16 %v153
    %v602 = vunpack.c.h.b16 %v153
    %v603 = vunpack.c.l.b16 %v154
    %v604 = vunpack.c.l.b16 %v155
    %v605 = vunpack.c.h.b16 %v155
    %v606 = vunpack.c.l.b16 %v156
    %v607 = vunpack.c.l.b16 %v157
    %v608 = vunpack.c.h.b16 %v157
    %v609 = vunpack.c.l.b16 %v158
    %v610 = vunpack.c.l.b16 %v159
    %v611 = vunpack.c.h.b16 %v159
    %v612 = vunpack.c.l.b16 %v160
    %v613 = vunpack.c.l.b16 %v161
    %v614 = vunpack.c.h.b16 %v161
    %v615 = vunpack.c.l.b16 %v162
    %v616 = vunpack.c.l.b16 %v163
    %v617 = vunpack.c.h.b16 %v163
    %v618 = vunpack.c.l.b16 %v164
    %v619 = vunpack.c.l.b16 %v165
    %v620 = vunpack.c.h.b16 %v165
    %v621 = vunpack.c.l.b16 %v166
    %v622 = vunpack.c.l.b16 %v167
    %v623 = vunpack.c.h.b16 %v167
    %v624 = vunpack.c.l.b16 %v168
    %v625 = vunpack.c.l.b16 %v169
    %v626 = vunpack.c.h.b16 %v169
    %v627 = vunpack.c.l.b16 %v170
    %v628 = vunpack.c.l.b16 %v171
    %v629 = vunpack.c.h.b16 %v171
    %v630 = vunpack.c.l.b16 %v172
    %v631 = vunpack.c.l.b16 %v173
    %v632 = vunpack.c.h.b16 %v173
    %v633 = vunpack.c.l.b16 %v174
    %v634 = vunpack.c.l.b16 %v175
    %v635 = vunpack.c.h.b16 %v175
    %v636 = vunpack.c.l.b16 %v176
    %v637 = vunpack.c.l.b16 %v177
    %v638 = vunpack.c.h.b16 %v177
    %v639 = vunpack.c.l.b16 %v178
    %v640 = vunpack.c.l.b16 %v179
    %v641 = vunpack.c.h.b16 %v179
    %v642 = vunpack.c.l.b16 %v180
    %v643 = vunpack.c.l.b16 %v181
    %v644 = vunpack.c.h.b16 %v181
    %v645 = vunpack.c.l.b16 %v182
    %v646 = vunpack.c.l.b16 %v183
    %v647 = vunpack.c.h.b16 %v183
    %v648 = vunpack.c.l.b16 %v184
    %v649 = vunpack.c.l.b16 %v185
    %v650 = vunpack.c.h.b16 %v185
    %v651 = vunpack.c.l.b16 %v186
    %v652 = vunpack.c.l.b16 %v187
    %v653 = vunpack.c.h.b16 %v187
    %v654 = vunpack.c.l.b16 %v188
    %v655 = vunpack.c.l.b16 %v189
    %v656 = vunpack.c.h.b16 %v189
    %v657 = vunpack.c.l.b16 %v190
    %v658 = vunpack.c.l.b16 %v191
    %v659 = vunpack.c.h.b16 %v191
    %v660 = vunpack.c.l.b16 %v192
    %v661 = vunpack.c.l.b16 %v193
    %v662 = vunpack.c.h.b16 %v193
    %v663 = vunpack.c.l.b16 %v194
    %v664 = vunpack.c.l.b16 %v195
    %v665 = vunpack.c.h.b16 %v195
    %v666 = vunpack.c.l.b16 %v196
    %v667 = vunpack.c.l.b16 %v197
    %v668 = vunpack.c.h.b16 %v197
    %v669 = vunpack.c.l.b16 %v198
    %v670 = vunpack.c.l.b16 %v199
    %v671 = vunpack.c.h.b16 %v199
    %v672 = vunpack.c.l.b16 %v200
    %v673 = vunpack.c.l.b16 %v201
    %v674 = vunpack.c.h.b16 %v201
    %v675 = vunpack.c.l.b16 %v202
    %v676 = vunpack.c.l.b16 %v203
    %v677 = vunpack.c.h.b16 %v203
    %v678 = vunpack.c.l.b16 %v204
    %v679 = vunpack.c.l.b16 %v205
    %v680 = vunpack.c.h.b16 %v205
    %v681 = vunpack.c.l.b16 %v206
    %v682 = vunpack.c.l.b16 %v207
    %v683 = vunpack.c.h.b16 %v207
    %v684 = vunpack.c.l.b16 %v208
    %v685 = vunpack.c.l.b16 %v209
    %v686 = vunpack.c.h.b16 %v209
    %v687 = vunpack.c.l.b16 %v210
    %v688 = vunpack.c.l.b16 %v211
    %v689 = vunpack.c.h.b16 %v211
    %v690 = vunpack.c.l.b16 %v212
    %v691 = vunpack.c.l.b16 %v213
    %v692 = vunpack.c.h.b16 %v213
    %v693 = vunpack.c.l.b16 %v214
    %v694 = vunpack.c.l.b16 %v215
    %v695 = vunpack.c.h.b16 %v215
    %v696 = vunpack.c.l.b16 %v216
    %v697 = vunpack.c.l.b16 %v217
    %v698 = vunpack.c.h.b16 %v217
    %v699 = vunpack.c.l.b16 %v218
    %v700 = vunpack.c.l.b16 %v219
    %v701 = vunpack.c.h.b16 %v219
    %v702 = vunpack.c.l.b16 %v220
    %v703 = vunpack.c.l.b16 %v221
    %v704 = vunpack.c.h.b16 %v221
    %v705 = vunpack.c.l.b16 %v222
    %v706 = vunpack.c.l.b16 %v223
    %v707 = vunpack.c.h.b16 %v223
    %v708 = vunpack.c.l.b16 %v224
    %v709 = vunpack.c.l.b16 %v225
    %v710 = vunpack.c.h.b16 %v225
    %v711 = vunpack.c.l.b16 %v226
    %v712 = vunpack.c.l.b16 %v227
    %v713 = vunpack.c.h.b16 %v227
    %v714 = vunpack.c.l.b16 %v228
    %v715 = vunpack.c.l.b16 %v229
    %v716 = vunpack.c.h.b16 %v229
    %v717 = vunpack.c.l.b16 %v230
    %v718 = vunpack.c.l.b16 %v231
    %v719 = vunpack.c.h.b16 %v231
    %v720 = vunpack.c.l.b16 %v232
    %v721 = vunpack.c.l.b16 %v233
    %v722 = vunpack.c.h.b16 %v233
    %v723 = vunpack.c.l.b16 %v234
    %v724 = vunpack.c.l.b16 %v235
    %v725 = vunpack.c.h.b16 %v235
    %v726 = vunpack.c.l.b16 %v236
    %v727 = vunpack.c.l.b16 %v237
    %v728 = vunpack.c.h.b16 %v237
    %v729 = vunpack.c.l.b16 %v238
    %v730 = vunpack.c.l.b16 %v239
    %v731 = vunpack.c.h.b16 %v239
    %v732 = vunpack.c.l.b16 %v240
    %v733 = vunpack.c.l.b16 %v241
    %v734 = vunpack.c.h.b16 %v241
    %v735 = vunpack.c.l.b16 %v242
    %v736 = vunpack.c.l.b16 %v243
    %v737 = vunpack.c.h.b16 %v243
    %v738 = vunpack.c.l.b16 %v244
    %v739 = vunpack.c.l.b16 %v245
    %v740 = vunpack.c.h.b16 %v245
    %v741 = vunpack.c.l.b16 %v246
    %v742 = vunpack.c.l.b16 %v247
    %v743 = vunpack.c.h.b16 %v247
    %v744 = vunpack.c.l.b16 %v248
    %v745 = vunpack.c.l.b16 %v249
    %v746 = vunpack.c.h.b16 %v249
    %v747 = vunpack.c.l.b16 %v250
    %v748 = vunpack.c.l.b16 %v251
    %v749 = vunpack.c.h.b16 %v251
    %v750 = vunpack.c.l.b16 %v252
    %v751 = vunpack.c.l.b16 %v253
    %v752 = vunpack.c.h.b16 %v253
    %v753 = vunpack.c.l.b16 %v254
    %v754 = vunpack.c.l.b16 %v255
    %v755 = vunpack.c.h.b16 %v255
    %v756 = vunpack.c.l.b16 %v256
    %v757 = vunpack.c.l.b16 %v257
    %v758 = vunpack.c.h.b16 %v257
    %v759 = vunpack.c.l.b16 %v258
    %v760 = vunpack.c.l.b16 %v259
    %v761 = vunpack.c.h.b16 %v259
    %v762 = vunpack.c.l.b16 %v260
    %v763 = vunpack.c.l.b16 %v261
    %v764 = vunpack.c.h.b16 %v261
    %v765 = vunpack.c.l.b16 %v262
    %v766 = vunpack.c.l.b16 %v263
    %v767 = vunpack.c.h.b16 %v263
    %v768 = vunpack.c.l.b16 %v264
    %v769 = vunpack.c.l.b16 %v265
    %v770 = vunpack.c.h.b16 %v265
    %v771 = vunpack.c.l.b16 %v266
    %v772 = vunpack.c.l.b16 %v267
    %v773 = vunpack.c.h.b16 %v267
    %v774 = vunpack.c.l.b16 %v268
    %v775 = vunpack.c.l.b16 %v269
    %v776 = vunpack.c.h.b16 %v269
    %v777 = vunpack.c.l.b16 %v270
    %v778 = vunpack.c.l.b16 %v271
    %v779 = vunpack.c.h.b16 %v271
    %v780 = vunpack.c.l.b16 %v272
    %v781 = vunpack.c.l.b16 %v273
    %v782 = vunpack.c.h.b16 %v273
    %v783 = vunpack.c.l.b16 %v274
    %v784 = vpack.c.b16 %v499, %v496
    %v785 = vpack.c.b16 %v500, %v497
    %v786 = vpack.c.b16 %v501, %v498
    %v787 = vpack.c.b16 %v505, %v502
    %v788 = vpack.c.b16 %v506, %v503
    %v789 = vpack.c.b16 %v507, %v504
    %v790 = vpack.c.b16 %v511, %v508
    %v791 = vpack.c.b16 %v512, %v509
    %v792 = vpack.c.b16 %v513, %v510
    %v793 = vpack.c.b16 %v517, %v514
    %v794 = vpack.c.b16 %v518, %v515
    %v795 = vpack.c.b16 %v519, %v516
    %v796 = vpack.c.b16 %v523, %v520
    %v797 = vpack.c.b16 %v524, %v521
    %v798 = vpack.c.b16 %v525, %v522
    %v799 = vpack.c.b16 %v529, %v526
    %v800 = vpack.c.b16 %v530, %v527
    %v801 = vpack.c.b16 %v531, %v528
    %v802 = vpack.c.b16 %v535, %v532
    %v803 = vpack.c.b16 %v536, %v533
    %v804 = vpack.c.b16 %v537, %v534
    %v805 = vpack.c.b16 %v541, %v538
    %v806 = vpack.c.b16 %v542, %v539
    %v807 = vpack.c.b16 %v543, %v540
    %v808 = vpack.c.b16 %v547, %v544
    %v809 = vpack.c.b16 %v548, %v545
    %v810 = vpack.c.b16 %v549, %v546
    %v811 = vpack.c.b16 %v553, %v550
    %v812 = vpack.c.b16 %v554, %v551
    %v813 = vpack.c.b16 %v555, %v552
    %v814 = vpack.c.b16 %v559, %v556
    %v815 = vpack.c.b16 %v560, %v557
    %v816 = vpack.c.b16 %v561, %v558
    %v817 = vpack.c.b16 %v565, %v562
    %v818 = vpack.c.b16 %v566, %v563
    %v819 = vpack.c.b16 %v567, %v564
    %v820 = vpack.c.b16 %v571, %v568
    %v821 = vpack.c.b16 %v572, %v569
    %v822 = vpack.c.b16 %v573, %v570
    %v823 = vpack.c.b16 %v577, %v574
    %v824 = vpack.c.b16 %v578, %v575
    %v825 = vpack.c.b16 %v579, %v576
    %v826 = vpack.c.b16 %v583, %v580
    %v827 = vpack.c.b16 %v584, %v581
    %v828 = vpack.c.b16 %v585, %v582
    %v829 = vpack.c.b16 %v589, %v586
    %v830 = vpack.c.b16 %v590, %v587
    %v831 = vpack.c.b16 %v591, %v588
    %v832 = vpack.c.b16 %v595, %v592
    %v833 = vpack.c.b16 %v596, %v593
    %v834 = vpack.c.b16 %v597, %v594
    %v835 = vpack.c.b16 %v601, %v598
    %v836 = vpack.c.b16 %v602, %v599
    %v837 = vpack.c.b16 %v603, %v600
    %v838 = vpack.c.b16 %v607, %v604
    %v839 = vpack.c.b16 %v608, %v605
    %v840 = vpack.c.b16 %v609, %v606
    %v841 = vpack.c.b16 %v613, %v610
    %v842 = vpack.c.b16 %v614, %v611
    %v843 = vpack.c.b16 %v615, %v612
    %v844 = vpack.c.b16 %v619, %v616
    %v845 = vpack.c.b16 %v620, %v617
    %v846 = vpack.c.b16 %v621, %v618
    %v847 = vpack.c.b16 %v625, %v622
    %v848 = vpack.c.b16 %v626, %v623
    %v849 = vpack.c.b16 %v627, %v624
    %v850 = vpack.c.b16 %v631, %v628
    %v851 = vpack.c.b16 %v632, %v629
    %v852 = vpack.c.b16 %v633, %v630
    %v853 = vpack.c.b16 %v637, %v634
    %v854 = vpack.c.b16 %v638, %v635
    %v855 = vpack.c.b16 %v639, %v636
    %v856 = vpack.c.b16 %v643, %v640
    %v857 = vpack.c.b16 %v644, %v641
    %v858 = vpack.c.b16 %v645, %v642
    %v859 = vpack.c.b16 %v649, %v646
    %v860 = vpack.c.b16 %v650, %v647
    %v861 = vpack.c.b16 %v651, %v648
    %v862 = vpack.c.b16 %v655, %v652
    %v863 = vpack.c.b16 %v656, %v653
    %v864 = vpack.c.b16 %v657, %v654
    %v865 = vpack.c.b16 %v661, %v658
    %v866 = vpack.c.b16 %v662, %v659
    %v867 = vpack.c.b16 %v663, %v660
    %v868 = vpack.c.b16 %v667, %v664
    %v869 = vpack.c.b16 %v668, %v665
    %v870 = vpack.c.b16 %v669, %v666
    %v871 = vpack.c.b16 %v673, %v670
    %v872 = vpack.c.b16 %v674, %v671
    %v873 = vpack.c.b16 %v675, %v672
    %v874 = vpack.c.b16 %v679, %v676
    %v875 = vpack.c.b16 %v680, %v677
    %v876 = vpack.c.b16 %v681, %v678
    %v877 = vpack.c.b16 %v685, %v682
    %v878 = vpack.c.b16 %v686, %v683
    %v879 = vpack.c.b16 %v687, %v684
    %v880 = vpack.c.b16 %v691, %v688
    %v881 = vpack.c.b16 %v692, %v689
    %v882 = vpack.c.b16 %v693, %v690
    %v883 = vpack.c.b16 %v697, %v694
    %v884 = vpack.c.b16 %v698, %v695
    %v885 = vpack.c.b16 %v699, %v696
    %v886 = vpack.c.b16 %v703, %v700
    %v887 = vpack.c.b16 %v704, %v701
    %v888 = vpack.c.b16 %v705, %v702
    %v889 = vpack.c.b16 %v709, %v706
    %v890 = vpack.c.b16 %v710, %v707
    %v891 = vpack.c.b16 %v711, %v708
    %v892 = vpack.c.b16 %v715, %v712
    %v893 = vpack.c.b16 %v716, %v713
    %v894 = vpack.c.b16 %v717, %v714
    %v895 = vpack.c.b16 %v721, %v718
    %v896 = vpack.c.b16 %v722, %v719
    %v897 = vpack.c.b16 %v723, %v720
    %v898 = vpack.c.b16 %v727, %v724
    %v899 = vpack.c.b16 %v728, %v725
    %v900 = vpack.c.b16 %v729, %v726
    %v901 = vpack.c.b16 %v733, %v730
    %v902 = vpack.c.b16 %v734, %v731
    %v903 = vpack.c.b16 %v735, %v732
    %v904 = vpack.c.b16 %v739, %v736
    %v905 = vpack.c.b16 %v740, %v737
    %v906 = vpack.c.b16 %v741, %v738
    %v907 = vpack.c.b16 %v745, %v742
    %v908 = vpack.c.b16 %v746, %v743
    %v909 = vpack.c.b16 %v747, %v744
    %v910 = vpack.c.b16 %v751, %v748
    %v911 = vpack.c.b16 %v752, %v749
    %v912 = vpack.c.b16 %v753, %v750
    %v913 = vpack.c.b16 %v757, %v754
    %v914 = vpack.c.b16 %v758, %v755
    %v915 = vpack.c.b16 %v759, %v756
    %v916 = vpack.c.b16 %v763, %v760
    %v917 = vpack.c.b16 %v764, %v761
    %v918 = vpack.c.b16 %v765, %v762
    %v919 = vpack.c.b16 %v769, %v766
    %v920 = vpack.c.b16 %v770, %v767
    %v921 = vpack.c.b16 %v771, %v768
    %v922 = vpack.c.b16 %v775, %v772
    %v923 = vpack.c.b16 %v776, %v773
    %v924 = vpack.c.b16 %v777, %v774
    %v925 = vpack.c.b16 %v781, %v778
    %v926 = vpack.c.b16 %v782, %v779
    %v927 = vpack.c.b16 %v783, %v780
    %1072 = vmatpush.bf16.msra.mxu0 %v805
    %1073 = vmatpush.bf16.msra.mxu0 %v802
    %1074 = vmatpush.bf16.msra.mxu0 %v799
    %1075 = vmatpush.bf16.msra.mxu0 %v796
    %1076 = vmatpush.bf16.msra.mxu0 %v793
    %1077 = vmatpush.bf16.msra.mxu0 %v790
    %1078 = vmatpush.bf16.msra.mxu0 %v787
    %1079 = vmatpush.bf16.msra.mxu0 %v784
    %1080 = vmatmul.bf16.gmra.mxu0 %v292
    %v1081 = vpop.f32.mrf.mxu0
    %v1082 = vadd.f32 %v277, %v1081
    %v1083 = vpop.f32.mrf.mxu0
    %1084 = vdwg.mxu0
    %1085 = vmatpush.bf16.msra.mxu0 %v829
    %1086 = vmatpush.bf16.msra.mxu0 %v826
    %1087 = vmatpush.bf16.msra.mxu0 %v823
    %1088 = vmatpush.bf16.msra.mxu0 %v820
    %1089 = vmatpush.bf16.msra.mxu0 %v817
    %1090 = vmatpush.bf16.msra.mxu0 %v814
    %1091 = vmatpush.bf16.msra.mxu0 %v811
    %1092 = vmatpush.bf16.msra.mxu0 %v808
    %1093 = vmatmul.bf16.gmra.mxu0 %v293
    %v1094 = vpop.f32.mrf.mxu0
    %v1095 = vadd.f32 %v1082, %v1094
    %v1096 = vpop.f32.mrf.mxu0
    %1097 = vdwg.mxu0
    %1098 = vmatpush.bf16.msra.mxu0 %v853
    %1099 = vmatpush.bf16.msra.mxu0 %v850
    %1100 = vmatpush.bf16.msra.mxu0 %v847
    %1101 = vmatpush.bf16.msra.mxu0 %v844
    %1102 = vmatpush.bf16.msra.mxu0 %v841
    %1103 = vmatpush.bf16.msra.mxu0 %v838
    %1104 = vmatpush.bf16.msra.mxu0 %v835
    %1105 = vmatpush.bf16.msra.mxu0 %v832
    %1106 = vmatmul.bf16.gmra.mxu0 %v294
    %v1107 = vpop.f32.mrf.mxu0
    %v1108 = vadd.f32 %v1095, %v1107
    %v1109 = vpop.f32.mrf.mxu0
    %1110 = vdwg.mxu0
    %1111 = vmatpush.bf16.msra.mxu0 %v877
    %1112 = vmatpush.bf16.msra.mxu0 %v874
    %1113 = vmatpush.bf16.msra.mxu0 %v871
    %1114 = vmatpush.bf16.msra.mxu0 %v868
    %1115 = vmatpush.bf16.msra.mxu0 %v865
    %1116 = vmatpush.bf16.msra.mxu0 %v862
    %1117 = vmatpush.bf16.msra.mxu0 %v859
    %1118 = vmatpush.bf16.msra.mxu0 %v856
    %1119 = vmatmul.bf16.gmra.mxu0 %v295
    %v1120 = vpop.f32.mrf.mxu0
    %v1121 = vadd.f32 %v1108, %v1120
    %v1122 = vpop.f32.mrf.mxu0
    %1123 = vdwg.mxu0
    %1124 = vmatpush.bf16.msra.mxu0 %v901
    %1125 = vmatpush.bf16.msra.mxu0 %v898
    %1126 = vmatpush.bf16.msra.mxu0 %v895
    %1127 = vmatpush.bf16.msra.mxu0 %v892
    %1128 = vmatpush.bf16.msra.mxu0 %v889
    %1129 = vmatpush.bf16.msra.mxu0 %v886
    %1130 = vmatpush.bf16.msra.mxu0 %v883
    %1131 = vmatpush.bf16.msra.mxu0 %v880
    %1132 = vmatmul.bf16.gmra.mxu0 %v296
    %v1133 = vpop.f32.mrf.mxu0
    %v1134 = vadd.f32 %v1121, %v1133
    %v1135 = vpop.f32.mrf.mxu0
    %1136 = vdwg.mxu0
    %1137 = vmatpush.bf16.msra.mxu0 %v925
    %1138 = vmatpush.bf16.msra.mxu0 %v922
    %1139 = vmatpush.bf16.msra.mxu0 %v919
    %1140 = vmatpush.bf16.msra.mxu0 %v916
    %1141 = vmatpush.bf16.msra.mxu0 %v913
    %1142 = vmatpush.bf16.msra.mxu0 %v910
    %1143 = vmatpush.bf16.msra.mxu0 %v907
    %1144 = vmatpush.bf16.msra.mxu0 %v904
    %1145 = vmatmul.bf16.gmra.mxu0 %v297
    %v1146 = vpop.f32.mrf.mxu0
    %v1147 = vadd.f32 %v1134, %v1146
    %v1148 = vpop.f32.mrf.mxu0
    %1149 = vdwg.mxu0
    %1150 = vmatpush.bf16.msra.mxu0 %v806
    %1151 = vmatpush.bf16.msra.mxu0 %v803
    %1152 = vmatpush.bf16.msra.mxu0 %v800
    %1153 = vmatpush.bf16.msra.mxu0 %v797
    %1154 = vmatpush.bf16.msra.mxu0 %v794
    %1155 = vmatpush.bf16.msra.mxu0 %v791
    %1156 = vmatpush.bf16.msra.mxu0 %v788
    %1157 = vmatpush.bf16.msra.mxu0 %v785
    %1158 = vmatmul.bf16.gmra.mxu0 %v292
    %v1159 = vpop.f32.mrf.mxu0
    %v1160 = vadd.f32 %v278, %v1159
    %v1161 = vpop.f32.mrf.mxu0
    %1162 = vdwg.mxu0
    %1163 = vmatpush.bf16.msra.mxu0 %v830
    %1164 = vmatpush.bf16.msra.mxu0 %v827
    %1165 = vmatpush.bf16.msra.mxu0 %v824
    %1166 = vmatpush.bf16.msra.mxu0 %v821
    %1167 = vmatpush.bf16.msra.mxu0 %v818
    %1168 = vmatpush.bf16.msra.mxu0 %v815
    %1169 = vmatpush.bf16.msra.mxu0 %v812
    %1170 = vmatpush.bf16.msra.mxu0 %v809
    %1171 = vmatmul.bf16.gmra.mxu0 %v293
    %v1172 = vpop.f32.mrf.mxu0
    %v1173 = vadd.f32 %v1160, %v1172
    %v1174 = vpop.f32.mrf.mxu0
    %1175 = vdwg.mxu0
    %1176 = vmatpush.bf16.msra.mxu0 %v854
    %1177 = vmatpush.bf16.msra.mxu0 %v851
    %1178 = vmatpush.bf16.msra.mxu0 %v848
    %1179 = vmatpush.bf16.msra.mxu0 %v845
    %1180 = vmatpush.bf16.msra.mxu0 %v842
    %1181 = vmatpush.bf16.msra.mxu0 %v839
    %1182 = vmatpush.bf16.msra.mxu0 %v836
    %1183 = vmatpush.bf16.msra.mxu0 %v833
    %1184 = vmatmul.bf16.gmra.mxu0 %v294
    %v1185 = vpop.f32.mrf.mxu0
    %v1186 = vadd.f32 %v1173, %v1185
    %v1187 = vpop.f32.mrf.mxu0
    %1188 = vdwg.mxu0
    %1189 = vmatpush.bf16.msra.mxu0 %v878
    %1190 = vmatpush.bf16.msra.mxu0 %v875
    %1191 = vmatpush.bf16.msra.mxu0 %v872
    %1192 = vmatpush.bf16.msra.mxu0 %v869
    %1193 = vmatpush.bf16.msra.mxu0 %v866
    %1194 = vmatpush.bf16.msra.mxu0 %v863
    %1195 = vmatpush.bf16.msra.mxu0 %v860
    %1196 = vmatpush.bf16.msra.mxu0 %v857
    %1197 = vmatmul.bf16.gmra.mxu0 %v295
    %v1198 = vpop.f32.mrf.mxu0
    %v1199 = vadd.f32 %v1186, %v1198
    %v1200 = vpop.f32.mrf.mxu0
    %1201 = vdwg.mxu0
    %1202 = vmatpush.bf16.msra.mxu0 %v902
    %1203 = vmatpush.bf16.msra.mxu0 %v899
    %1204 = vmatpush.bf16.msra.mxu0 %v896
    %1205 = vmatpush.bf16.msra.mxu0 %v893
    %1206 = vmatpush.bf16.msra.mxu0 %v890
    %1207 = vmatpush.bf16.msra.mxu0 %v887
    %1208 = vmatpush.bf16.msra.mxu0 %v884
    %1209 = vmatpush.bf16.msra.mxu0 %v881
    %1210 = vmatmul.bf16.gmra.mxu0 %v296
    %v1211 = vpop.f32.mrf.mxu0
    %v1212 = vadd.f32 %v1199, %v1211
    %v1213 = vpop.f32.mrf.mxu0
    %1214 = vdwg.mxu0
    %1215 = vmatpush.bf16.msra.mxu0 %v926
    %1216 = vmatpush.bf16.msra.mxu0 %v923
    %1217 = vmatpush.bf16.msra.mxu0 %v920
    %1218 = vmatpush.bf16.msra.mxu0 %v917
    %1219 = vmatpush.bf16.msra.mxu0 %v914
    %1220 = vmatpush.bf16.msra.mxu0 %v911
    %1221 = vmatpush.bf16.msra.mxu0 %v908
    %1222 = vmatpush.bf16.msra.mxu0 %v905
    %1223 = vmatmul.bf16.gmra.mxu0 %v297
    %v1224 = vpop.f32.mrf.mxu0
    %v1225 = vadd.f32 %v1212, %v1224
    %v1226 = vpop.f32.mrf.mxu0
    %1227 = vdwg.mxu0
    %1228 = vmatpush.bf16.msra.mxu0 %v807
    %1229 = vmatpush.bf16.msra.mxu0 %v804
    %1230 = vmatpush.bf16.msra.mxu0 %v801
    %1231 = vmatpush.bf16.msra.mxu0 %v798
    %1232 = vmatpush.bf16.msra.mxu0 %v795
    %1233 = vmatpush.bf16.msra.mxu0 %v792
    %1234 = vmatpush.bf16.msra.mxu0 %v789
    %1235 = vmatpush.bf16.msra.mxu0 %v786
    %1236 = vmatmul.bf16.gmra.mxu0 %v292
    %v1237 = vpop.f32.mrf.mxu0
    %v1238 = vadd.f32 %v279, %v1237
    %v1239 = vpop.f32.mrf.mxu0
    %1240 = vdwg.mxu0
    %1241 = vmatpush.bf16.msra.mxu0 %v831
    %1242 = vmatpush.bf16.msra.mxu0 %v828
    %1243 = vmatpush.bf16.msra.mxu0 %v825
    %1244 = vmatpush.bf16.msra.mxu0 %v822
    %1245 = vmatpush.bf16.msra.mxu0 %v819
    %1246 = vmatpush.bf16.msra.mxu0 %v816
    %1247 = vmatpush.bf16.msra.mxu0 %v813
    %1248 = vmatpush.bf16.msra.mxu0 %v810
    %1249 = vmatmul.bf16.gmra.mxu0 %v293
    %v1250 = vpop.f32.mrf.mxu0
    %v1251 = vadd.f32 %v1238, %v1250
    %v1252 = vpop.f32.mrf.mxu0
    %1253 = vdwg.mxu0
    %1254 = vmatpush.bf16.msra.mxu0 %v855
    %1255 = vmatpush.bf16.msra.mxu0 %v852
    %1256 = vmatpush.bf16.msra.mxu0 %v849
    %1257 = vmatpush.bf16.msra.mxu0 %v846
    %1258 = vmatpush.bf16.msra.mxu0 %v843
    %1259 = vmatpush.bf16.msra.mxu0 %v840
    %1260 = vmatpush.bf16.msra.mxu0 %v837
    %1261 = vmatpush.bf16.msra.mxu0 %v834
    %1262 = vmatmul.bf16.gmra.mxu0 %v294
    %v1263 = vpop.f32.mrf.mxu0
    %v1264 = vadd.f32 %v1251, %v1263
    %v1265 = vpop.f32.mrf.mxu0
    %1266 = vdwg.mxu0
    %1267 = vmatpush.bf16.msra.mxu0 %v879
    %1268 = vmatpush.bf16.msra.mxu0 %v876
    %1269 = vmatpush.bf16.msra.mxu0 %v873
    %1270 = vmatpush.bf16.msra.mxu0 %v870
    %1271 = vmatpush.bf16.msra.mxu0 %v867
    %1272 = vmatpush.bf16.msra.mxu0 %v864
    %1273 = vmatpush.bf16.msra.mxu0 %v861
    %1274 = vmatpush.bf16.msra.mxu0 %v858
    %1275 = vmatmul.bf16.gmra.mxu0 %v295
    %v1276 = vpop.f32.mrf.mxu0
    %v1277 = vadd.f32 %v1264, %v1276
    %v1278 = vpop.f32.mrf.mxu0
    %1279 = vdwg.mxu0
    %1280 = vmatpush.bf16.msra.mxu0 %v903
    %1281 = vmatpush.bf16.msra.mxu0 %v900
    %1282 = vmatpush.bf16.msra.mxu0 %v897
    %1283 = vmatpush.bf16.msra.mxu0 %v894
    %1284 = vmatpush.bf16.msra.mxu0 %v891
    %1285 = vmatpush.bf16.msra.mxu0 %v888
    %1286 = vmatpush.bf16.msra.mxu0 %v885
    %1287 = vmatpush.bf16.msra.mxu0 %v882
    %1288 = vmatmul.bf16.gmra.mxu0 %v296
    %v1289 = vpop.f32.mrf.mxu0
    %v1290 = vadd.f32 %v1277, %v1289
    %v1291 = vpop.f32.mrf.mxu0
    %1292 = vdwg.mxu0
    %1293 = vmatpush.bf16.msra.mxu0 %v927
    %1294 = vmatpush.bf16.msra.mxu0 %v924
    %1295 = vmatpush.bf16.msra.mxu0 %v921
    %1296 = vmatpush.bf16.msra.mxu0 %v918
    %1297 = vmatpush.bf16.msra.mxu0 %v915
    %1298 = vmatpush.bf16.msra.mxu0 %v912
    %1299 = vmatpush.bf16.msra.mxu0 %v909
    %1300 = vmatpush.bf16.msra.mxu0 %v906
    %1301 = vmatmul.bf16.gmra.mxu0 %v297
    %v1302 = vpop.f32.mrf.mxu0
    %v1303 = vadd.f32 %v1290, %v1302
    %v1304 = vpop.f32.mrf.mxu0
    %1305 = vdwg.mxu0
    %v1306 = vtanh.pop %v1147
    %v1307 = vtanh.pop %v1225
    %v1308 = vtanh.pop %v1303
    %v1309 = vpack.c.bf16 %v1306, %v1306
    %v1310 = vpack.c.bf16 %v1307, %v1307
    %v1311 = vpack.c.bf16 %v1308, %v1308
    %v1312 = vld [vmem:[#allocation8] sm:$0xf]
    %v1313 = vld [vmem:[#allocation8 + $0x4] sm:$0xf]
    %v1314 = vld [vmem:[#allocation8 + $0x8] sm:$0xf]
    %v1315 = vld [vmem:[#allocation8 + $0xc] sm:$0xf]
    %v1316 = vld [vmem:[#allocation8 + $0x10] sm:$0xf]
    %v1317 = vld [vmem:[#allocation8 + $0x14] sm:$0xf]
    %v1318 = vld [vmem:[#allocation8 + $0x18] sm:$0xf]
    %v1319 = vld [vmem:[#allocation8 + $0x1c] sm:$0xf]
    %v1320 = vld [vmem:[#allocation8 + $0x20] sm:$0xf]
    %v1321 = vld [vmem:[#allocation8 + $0x24] sm:$0xf]
    %v1322 = vld [vmem:[#allocation8 + $0x28] sm:$0xf]
    %v1323 = vld [vmem:[#allocation8 + $0x2c] sm:$0xf]
    %v1324 = vld [vmem:[#allocation8 + $0x30] sm:$0xf]
    %v1325 = vld [vmem:[#allocation8 + $0x34] sm:$0xf]
    %v1326 = vld [vmem:[#allocation8 + $0x38] sm:$0xf]
    %v1327 = vld [vmem:[#allocation8 + $0x3c] sm:$0xf]
    %v1328 = vld [vmem:[#allocation8 + $0x40] sm:$0xf]
    %v1329 = vld [vmem:[#allocation8 + $0x44] sm:$0xf]
    %v1330 = vld [vmem:[#allocation8 + $0x48] sm:$0xf]
    %v1331 = vld [vmem:[#allocation8 + $0x4c] sm:$0xf]
    %v1332 = vld [vmem:[#allocation8 + $0x50] sm:$0xf]
    %v1333 = vld [vmem:[#allocation8 + $0x54] sm:$0xf]
    %v1334 = vld [vmem:[#allocation8 + $0x58] sm:$0xf]
    %v1335 = vld [vmem:[#allocation8 + $0x5c] sm:$0xf]
    %v1336 = vld [vmem:[#allocation8 + $0x60] sm:$0xf]
    %v1337 = vld [vmem:[#allocation8 + $0x64] sm:$0xf]
    %v1338 = vld [vmem:[#allocation8 + $0x68] sm:$0xf]
    %v1339 = vld [vmem:[#allocation8 + $0x6c] sm:$0xf]
    %v1340 = vld [vmem:[#allocation8 + $0x70] sm:$0xf]
    %v1341 = vld [vmem:[#allocation8 + $0x74] sm:$0xf]
    %v1342 = vld [vmem:[#allocation8 + $0x78] sm:$0xf]
    %v1343 = vld [vmem:[#allocation8 + $0x7c] sm:$0xf]
    %v1344 = vld [vmem:[#allocation8 + $0x80] sm:$0xf]
    %v1345 = vld [vmem:[#allocation8 + $0x84] sm:$0xf]
    %v1346 = vld [vmem:[#allocation8 + $0x88] sm:$0xf]
    %v1347 = vld [vmem:[#allocation8 + $0x8c] sm:$0xf]
    %v1348 = vld [vmem:[#allocation8 + $0x90] sm:$0xf]
    %v1349 = vld [vmem:[#allocation8 + $0x94] sm:$0xf]
    %v1350 = vld [vmem:[#allocation8 + $0x98] sm:$0xf]
    %v1351 = vld [vmem:[#allocation8 + $0x9c] sm:$0xf]
    %v1352 = vld [vmem:[#allocation8 + $0xa0] sm:$0xf]
    %v1353 = vld [vmem:[#allocation8 + $0xa4] sm:$0xf]
    %v1354 = vld [vmem:[#allocation8 + $0xa8] sm:$0xf]
    %v1355 = vld [vmem:[#allocation8 + $0xac] sm:$0xf]
    %v1356 = vld [vmem:[#allocation8 + $0xb0] sm:$0xf]
    %v1357 = vld [vmem:[#allocation8 + $0xb4] sm:$0xf]
    %v1358 = vld [vmem:[#allocation8 + $0xb8] sm:$0xf]
    %v1359 = vld [vmem:[#allocation8 + $0xbc] sm:$0xf]
    %v1360 = vld [vmem:[%s4] sm:$0x1]
    %v1362 = vperm.slane %v1360, 0
    %v1412 = vunpack.c.l.b16 %v1312
    %v1413 = vunpack.c.l.b16 %v1313
    %v1414 = vunpack.c.l.b16 %v1314
    %v1415 = vunpack.c.l.b16 %v1315
    %v1416 = vunpack.c.l.b16 %v1316
    %v1417 = vunpack.c.l.b16 %v1317
    %v1418 = vunpack.c.l.b16 %v1318
    %v1419 = vunpack.c.l.b16 %v1319
    %v1420 = vunpack.c.l.b16 %v1320
    %v1421 = vunpack.c.l.b16 %v1321
    %v1422 = vunpack.c.l.b16 %v1322
    %v1423 = vunpack.c.l.b16 %v1323
    %v1424 = vunpack.c.l.b16 %v1324
    %v1425 = vunpack.c.l.b16 %v1325
    %v1426 = vunpack.c.l.b16 %v1326
    %v1427 = vunpack.c.l.b16 %v1327
    %v1428 = vunpack.c.l.b16 %v1328
    %v1429 = vunpack.c.l.b16 %v1329
    %v1430 = vunpack.c.l.b16 %v1330
    %v1431 = vunpack.c.l.b16 %v1331
    %v1432 = vunpack.c.l.b16 %v1332
    %v1433 = vunpack.c.l.b16 %v1333
    %v1434 = vunpack.c.l.b16 %v1334
    %v1435 = vunpack.c.l.b16 %v1335
    %v1436 = vunpack.c.l.b16 %v1336
    %v1437 = vunpack.c.l.b16 %v1337
    %v1438 = vunpack.c.l.b16 %v1338
    %v1439 = vunpack.c.l.b16 %v1339
    %v1440 = vunpack.c.l.b16 %v1340
    %v1441 = vunpack.c.l.b16 %v1341
    %v1442 = vunpack.c.l.b16 %v1342
    %v1443 = vunpack.c.l.b16 %v1343
    %v1444 = vunpack.c.l.b16 %v1344
    %v1445 = vunpack.c.l.b16 %v1345
    %v1446 = vunpack.c.l.b16 %v1346
    %v1447 = vunpack.c.l.b16 %v1347
    %v1448 = vunpack.c.l.b16 %v1348
    %v1449 = vunpack.c.l.b16 %v1349
    %v1450 = vunpack.c.l.b16 %v1350
    %v1451 = vunpack.c.l.b16 %v1351
    %v1452 = vunpack.c.l.b16 %v1352
    %v1453 = vunpack.c.l.b16 %v1353
    %v1454 = vunpack.c.l.b16 %v1354
    %v1455 = vunpack.c.l.b16 %v1355
    %v1456 = vunpack.c.l.b16 %v1356
    %v1457 = vunpack.c.l.b16 %v1357
    %v1458 = vunpack.c.l.b16 %v1358
    %v1459 = vunpack.c.l.b16 %v1359
    %v1460 = vpack.c.b16 %v1413, %v1412
    %v1461 = vpack.c.b16 %v1415, %v1414
    %v1462 = vpack.c.b16 %v1417, %v1416
    %v1463 = vpack.c.b16 %v1419, %v1418
    %v1464 = vpack.c.b16 %v1421, %v1420
    %v1465 = vpack.c.b16 %v1423, %v1422
    %v1466 = vpack.c.b16 %v1425, %v1424
    %v1467 = vpack.c.b16 %v1427, %v1426
    %v1468 = vpack.c.b16 %v1429, %v1428
    %v1469 = vpack.c.b16 %v1431, %v1430
    %v1470 = vpack.c.b16 %v1433, %v1432
    %v1471 = vpack.c.b16 %v1435, %v1434
    %v1472 = vpack.c.b16 %v1437, %v1436
    %v1473 = vpack.c.b16 %v1439, %v1438
    %v1474 = vpack.c.b16 %v1441, %v1440
    %v1475 = vpack.c.b16 %v1443, %v1442
    %v1476 = vpack.c.b16 %v1445, %v1444
    %v1477 = vpack.c.b16 %v1447, %v1446
    %v1478 = vpack.c.b16 %v1449, %v1448
    %v1479 = vpack.c.b16 %v1451, %v1450
    %v1480 = vpack.c.b16 %v1453, %v1452
    %v1481 = vpack.c.b16 %v1455, %v1454
    %v1482 = vpack.c.b16 %v1457, %v1456
    %v1483 = vpack.c.b16 %v1459, %v1458
    %1508 = vmatpush.bf16.msra.mxu0 %v1467
    %1509 = vmatpush.bf16.msra.mxu0 %v1466
    %1510 = vmatpush.bf16.msra.mxu0 %v1465
    %1511 = vmatpush.bf16.msra.mxu0 %v1464
    %1512 = vmatpush.bf16.msra.mxu0 %v1463
    %1513 = vmatpush.bf16.msra.mxu0 %v1462
    %1514 = vmatpush.bf16.msra.mxu0 %v1461
    %1515 = vmatpush.bf16.msra.mxu0 %v1460
    %1516 = vmatmul.bf16.gmra.mxu0 %v1309
    %v1517 = vpop.f32.mrf.mxu0
    %v1518 = vadd.f32 %v1362, %v1517
    %v1519 = vpop.f32.mrf.mxu0
    %1520 = vdwg.mxu0
    %1521 = vmatpush.bf16.msra.mxu0 %v1475
    %1522 = vmatpush.bf16.msra.mxu0 %v1474
    %1523 = vmatpush.bf16.msra.mxu0 %v1473
    %1524 = vmatpush.bf16.msra.mxu0 %v1472
    %1525 = vmatpush.bf16.msra.mxu0 %v1471
    %1526 = vmatpush.bf16.msra.mxu0 %v1470
    %1527 = vmatpush.bf16.msra.mxu0 %v1469
    %1528 = vmatpush.bf16.msra.mxu0 %v1468
    %1529 = vmatmul.bf16.gmra.mxu0 %v1310
    %v1530 = vpop.f32.mrf.mxu0
    %v1531 = vadd.f32 %v1518, %v1530
    %v1532 = vpop.f32.mrf.mxu0
    %1533 = vdwg.mxu0
    %1534 = vmatpush.bf16.msra.mxu0 %v1483
    %1535 = vmatpush.bf16.msra.mxu0 %v1482
    %1536 = vmatpush.bf16.msra.mxu0 %v1481
    %1537 = vmatpush.bf16.msra.mxu0 %v1480
    %1538 = vmatpush.bf16.msra.mxu0 %v1479
    %1539 = vmatpush.bf16.msra.mxu0 %v1478
    %1540 = vmatpush.bf16.msra.mxu0 %v1477
    %1541 = vmatpush.bf16.msra.mxu0 %v1476
    %1542 = vmatmul.bf16.gmra.mxu0 %v1311
    %v1543 = vpop.f32.mrf.mxu0
    %v1544 = vadd.f32 %v1531, %v1543
    %v1545 = vpop.f32.mrf.mxu0
    %1546 = vdwg.mxu0
    %1547 = vst [vmem:[#allocation10] sm:$0xff] %v1544
    // Predicated region
    $region38: #{tpu_custom_call.1} parent=1 // pred_check
      _
    $region39: #{tpu_custom_call.1} parent=1 // pred_check_branch
      %1549 = sbr.rel (0) target = $region41
    $region40: #{tpu_custom_call.1} parent=1 // pred_region
      %1551 = vsyncadd [#allocation4], 0
      %s1553 = sshll.u32 [#allocation10], 4
      %s1554 = int_to_ptr.vmem [resolvable:$true] %s1553
      %s1555 = sshll.u32 %s5, 4
      %s1556 = int_to_ptr.hbm [resolvable:$true] %s1555
      %1558 = dma.vmem_to_hbm [thread:$0]  %s1554, 128, %s1556, [#allocation4]
    $region41: #{tpu_custom_call.1} parent=1 // pred_fallthru
      _
    // Predicated region
    $region42: #{tpu_custom_call.1} parent=1 // pred_check
      _
    $region43: #{tpu_custom_call.1} parent=1 // pred_check_branch
      %1560 = sbr.rel (0) target = $region45
    $region44: #{tpu_custom_call.1} parent=1 // pred_region
      %1562 = dma.done [#allocation4], 128
    $region45: #{tpu_custom_call.1} parent=1 // pred_fallthru
      _
    %1563 = vsyncpa [#allocation3], 1
    %1564 = vsyncpa [#allocation6], 1
    %1565 = vsyncpa [#allocation9], 1
    %1566 = vsyncpa [#allocation4], 1

</llo_original>
